<compile_context>
chip_gen: v7x
topology: tpu7x:2x2x1
jax: 0.10.0
libtpu: 0.0.40
codegen_flags: <defaults>
</compile_context>

<pallas_src>
import jax
import jax.numpy as jnp
from jax.experimental import pallas as pl
from jax.experimental.pallas import tpu as pltpu

B = 2          # batch
C = 2048       # channels (fixed by nn.Linear(2048, 4))
H = W = 8      # small spatial dims
OUT = 4        # fc output features


def decoder_kernel(x_ref, w_ref, b_ref, o_ref):
    # x_ref: (1, C, HW)   one batch element (grid axis 0 = batch)
    # w_ref: (OUT, C)     fc weight, passed through untouched (lane-dense on C)
    # b_ref: (1, OUT)     fc bias
    # o_ref: (1, 1, OUT)  output logits row for this batch element
    hw = x_ref.shape[-1]
    x = x_ref[0]                                   # (C, HW)
    w = w_ref[...].astype(x.dtype)                 # tiny; no-op for f32 input
    # MXU: apply the fc before pooling (identical result, avoids a cross-lane
    # reduce over the big input tensor).
    y = jnp.dot(w, x, preferred_element_type=jnp.float32)   # (OUT, HW)
    # Pool over HW on the tiny (OUT, HW) result; fold in the 1/HW avg factor.
    row = jnp.sum(y, axis=-1) * (1.0 / hw)                   # (OUT,)
    out = row[None, :] + b_ref[...].astype(jnp.float32)      # (1, OUT)
    o_ref[...] = out[None, :, :].astype(o_ref.dtype)         # (1, 1, OUT)


def decoder_forward(x_nchw, fc_weight, fc_bias):
    """x_nchw: (B, C, H, W); fc_weight: (OUT, C); fc_bias: (OUT,)."""
    b, c, h, w = x_nchw.shape
    assert c == C and fc_weight.shape == (OUT, C) and fc_bias.shape == (OUT,)
    hw = h * w
    x = x_nchw.reshape(b, c, hw)            # metadata-only reshape
    bias2d = fc_bias.reshape(1, OUT)        # 16-byte reshape, fused away

    flops = 2 * b * OUT * c * hw            # fc-first MXU chain dominates
    bytes_accessed = (int(x.size) * x.dtype.itemsize
                      + int(fc_weight.size) * fc_weight.dtype.itemsize
                      + int(bias2d.size) * bias2d.dtype.itemsize
                      + b * OUT * 4)

    out = pl.pallas_call(
        decoder_kernel,
        out_shape=jax.ShapeDtypeStruct((b, 1, OUT), jnp.float32),
        grid_spec=pltpu.PrefetchScalarGridSpec(
            num_scalar_prefetch=0,
            grid=(b,),                                           # batch axis
            in_specs=[
                pl.BlockSpec((1, c, hw), lambda i: (i, 0, 0)),   # x[b]
                pl.BlockSpec((OUT, c), lambda i: (0, 0)),        # whole weight
                pl.BlockSpec((1, OUT), lambda i: (0, 0)),        # whole bias
            ],
            out_specs=pl.BlockSpec((1, 1, OUT), lambda i: (i, 0, 0)),
        ),
        compiler_params=pltpu.CompilerParams(
            dimension_semantics=("parallel",)),                  # megacore on v7x
        cost_estimate=pl.CostEstimate(
            flops=flops, transcendentals=0, bytes_accessed=bytes_accessed),
    )(x, fc_weight, bias2d)
    return out.reshape(b, OUT)


if __name__ == "__main__":
    key = jax.random.PRNGKey(0)
    kx, kw, kb = jax.random.split(key, 3)

    # Deterministic synthetic parameters (match nn.Linear(2048, 4) init range).
    bound = 1.0 / (C ** 0.5)
    fc_weight = jax.random.uniform(kw, (OUT, C), jnp.float32, -bound, bound)
    fc_bias = jax.random.uniform(kb, (OUT,), jnp.float32, -bound, bound)

    # Input in PyTorch NCHW layout.
    x = jax.random.normal(kx, (B, C, H, W), jnp.float32)

    out = decoder_forward(x, fc_weight, fc_bias)
    out = jax.block_until_ready(out)

    # Pure-JAX reference for a sanity check.
    pooled_ref = jnp.mean(x, axis=(2, 3))                 # (B, C)
    out_ref = pooled_ref @ fc_weight.T + fc_bias          # (B, OUT)
    assert out.shape == (B, OUT)
    assert jnp.allclose(out, out_ref, atol=1e-4, rtol=1e-4)

    print("KERNEL_OK")
</pallas_src>

<mosaic_0001>
module attributes {stable_mosaic.version = 11 : i64} {
  func.func @decoder_kernel(%arg0: i32, %arg1: memref<1x2048x64xf32, #tpu.memory_space<vmem>>, %arg2: memref<4x2048xf32, #tpu.memory_space<vmem>>, %arg3: memref<1x4xf32, #tpu.memory_space<vmem>>, %arg4: memref<1x1x4xf32, #tpu.memory_space<vmem>>) attributes {dimension_semantics = [#tpu.dimension_semantics<parallel>], iteration_bounds = array<i64: 2>, scalar_prefetch = 0 : i64, scratch_operands = 0 : i64, tpu.core_type = #tpu.core_type<tc>, window_params = [{transform_indices = @transform_0, window_bounds = array<i64: 1, 2048, 64>}, {pipeline_mode = #tpu.pipeline_mode<synchronous>, transform_indices = @transform_1, window_bounds = array<i64: 4, 2048>}, {pipeline_mode = #tpu.pipeline_mode<synchronous>, transform_indices = @transform_2, window_bounds = array<i64: 1, 4>}, {transform_indices = @transform_3, window_bounds = array<i64: 1, 1, 4>}]} {
    %c0 = arith.constant 0 : index
    %c0_0 = arith.constant 0 : index
    %c0_1 = arith.constant 0 : index
    %0 = vector.load %arg1[%c0, %c0_0, %c0_1] : memref<1x2048x64xf32, #tpu.memory_space<vmem>>, vector<1x2048x64xf32>
    %1 = vector.shape_cast %0 : vector<1x2048x64xf32> to vector<2048x64xf32>
    %c0_2 = arith.constant 0 : index
    %c0_3 = arith.constant 0 : index
    %2 = vector.load %arg2[%c0_2, %c0_3] : memref<4x2048xf32, #tpu.memory_space<vmem>>, vector<4x2048xf32>
    %cst = arith.constant dense<0.000000e+00> : vector<4x64xf32>
    %3 = tpu.matmul %2, %1, %cst {dimension_numbers = #tpu.dot_dimension_numbers<[1], [0], [0], [1], [0, 0, 1, 1], [], []>} : vector<4x2048xf32>, vector<2048x64xf32>, vector<4x64xf32> -> vector<4x64xf32>
    %cst_4 = arith.constant dense<0.000000e+00> : vector<4xf32>
    %4 = vector.multi_reduction <add>, %3, %cst_4 [1] : vector<4x64xf32> to vector<4xf32>
    %cst_5 = arith.constant 1.562500e-02 : f32
    %5 = vector.broadcast %cst_5 : f32 to vector<4xf32>
    %6 = arith.mulf %4, %5 : vector<4xf32>
    %7 = vector.shape_cast %6 : vector<4xf32> to vector<1x4xf32>
    %c0_6 = arith.constant 0 : index
    %c0_7 = arith.constant 0 : index
    %8 = vector.load %arg3[%c0_6, %c0_7] : memref<1x4xf32, #tpu.memory_space<vmem>>, vector<1x4xf32>
    %9 = arith.addf %7, %8 : vector<1x4xf32>
    %10 = vector.shape_cast %9 : vector<1x4xf32> to vector<1x1x4xf32>
    %c0_8 = arith.constant 0 : index
    %c0_9 = arith.constant 0 : index
    %c0_10 = arith.constant 0 : index
    %11 = vector.load %arg4[%c0_8, %c0_9, %c0_10] : memref<1x1x4xf32, #tpu.memory_space<vmem>>, vector<1x1x4xf32>
    tpu.vector_store %arg4[%c0_8, %c0_9, %c0_10], %10 {strides = array<i32>} : memref<1x1x4xf32, #tpu.memory_space<vmem>>, vector<1x1x4xf32>,
    return
  }
  func.func @transform_0(%arg0: i32) -> (i32, i32, i32) {
    %c0_i32 = arith.constant 0 : i32
    %c0_i32_0 = arith.constant 0 : i32
    %c0_i32_1 = arith.constant 0 : i32
    return %arg0, %c0_i32, %c0_i32_0 : i32, i32, i32
  }
  func.func @transform_1(%arg0: i32) -> (i32, i32) {
    %c0_i32 = arith.constant 0 : i32
    %c0_i32_0 = arith.constant 0 : i32
    %c0_i32_1 = arith.constant 0 : i32
    return %c0_i32, %c0_i32_0 : i32, i32
  }
  func.func @transform_2(%arg0: i32) -> (i32, i32) {
    %c0_i32 = arith.constant 0 : i32
    %c0_i32_0 = arith.constant 0 : i32
    %c0_i32_1 = arith.constant 0 : i32
    return %c0_i32, %c0_i32_0 : i32, i32
  }
  func.func @transform_3(%arg0: i32) -> (i32, i32, i32) {
    %c0_i32 = arith.constant 0 : i32
    %c0_i32_0 = arith.constant 0 : i32
    %c0_i32_1 = arith.constant 0 : i32
    return %arg0, %c0_i32, %c0_i32_0 : i32, i32, i32
  }
}

</mosaic_0001>

<llo_original>
// kernel: tpu_custom_call.1
$region0: #{tpu_custom_call.1}
  #allocation0 [shape = 'u32[]', space=smem, size = 0x4, offset = 0x4, fixed_abs, tag = 'smem constant byte address 0x4 - core index']
  #allocation1 [shape = 'u32[144,128]{1,0:T(1,128)}', space=vmem, size = 0x12000, scoped, tag = 'internal scratch']
  %s0 = inlined_call_operand.vmem [shape: f32[2,2048,64], index: 0, kind: input, shape index: {}]
  %s1 = inlined_call_operand.vmem [shape: f32[4,2048], index: 1, kind: input, shape index: {}]
  %s2 = inlined_call_operand.vmem [shape: f32[1,4], index: 2, kind: input, shape index: {}]
  %s3 = inlined_call_operand.hbm [shape: f32[2,1,4], index: 3, kind: output, shape index: {}]
  %s4 = sld [smem:[#allocation0]]
  $region45: #{tpu_custom_call.1} parent=0
    _
  %s6 = ssub.s32 1, %s4
  %s7 = scalar_select 0, %s6, %s4
  $region1: #{tpu_custom_call.1} parent=0
    #allocation2 [shape = 'u8[1024]{0}', space=vmem, size = 0x400, scoped, tag = 'output window, operand 0']
    #allocation3 [shape = 's32[2]{0}', space=sflag, size = 0x8, scoped, tag = 'scoped memory for tpu_custom_call.1']
    %8 = vsyncpa [#allocation3], 0
    %s9 = scalar_lea.sflag [#allocation3], 1
    %10 = vsyncpa %s9, 0
    loop: start=0, step=1, limit=4
    $region2: #{tpu_custom_call.1} parent=1 // loop_pre_header
      _
    $region3: #{tpu_custom_call.1} parent=1 // loop_header
      %s12 = sphi 0, %s16
      %p13 = scmp.ge.s32.totalorder %s12, 4
      %s22 = sphi 0, %s24
      %s25 = sphi 0, %s22
      %s26 = sphi 0, %s25
      %s42 = sphi 0, %s26
      %s46 = sphi 0, %s46
      %s48 = sphi 0, %s46
      %s49 = sphi 0, %s48
      %s63 = sphi 0, %s49
      %s67 = sphi 0, %s67
      %s69 = sphi 0, %s67
      %s70 = sphi 0, %s69
      %s84 = sphi 0, %s70
      %s90 = sphi 0, %s92
      %s93 = sphi 0, %s90
      %s94 = sphi 0, %s93
      %s110 = sphi 0, %s94
    $region4: #{tpu_custom_call.1} parent=1 // loop_header_branch
      %15 = sbr.rel (%p13) target = $region8
    $region5: #{tpu_custom_call.1} parent=1 // loop_body
      %s17 = ssub.s32 %s12, 1
      %s18 = ssub.s32 %s12, 2
      %s19 = sadd.s32 %s12, 1
      %s20 = ssub.s32 %s12, %s19
      %p21 = scmp.eq.s32.totalorder %s20, 0
      %s23 = sadd.s32 %s22, 1
      %s24 = scalar_select %p21, %s22, %s23
      %p27 = pneg %p21
      %p28 = scmp.eq.s32.totalorder %s12, 1
      %p29 = por %p27, %p28
      %p30 = scmp.ne.s32.totalorder %s22, %s25
      %p31 = scmp.eq.s32.totalorder %s12, 0
      %p32 = por %p30, %p31
      %p33 = scmp.ne.s32.totalorder %s22, %s25
      %p34 = scmp.eq.s32.totalorder %s17, 1
      %p35 = por %p33, %p34
      %p36 = scmp.ne.s32.totalorder %s25, %s26
      %p37 = scmp.eq.s32.totalorder %s17, 0
      %p38 = por %p36, %p37
      %p39 = scmp.ne.s32.totalorder %s25, %s26
      %p40 = scmp.eq.s32.totalorder %s18, 1
      %p41 = por %p39, %p40
      %p43 = scmp.ne.s32.totalorder %s26, %s42
      %p44 = scmp.eq.s32.totalorder %s18, 0
      %p45 = por %p43, %p44
      %s47 = sadd.s32 %s46, 1
      %p50 = scmp.eq.s32.totalorder %s12, 1
      %p51 = scmp.ne.s32.totalorder %s46, %s48
      %p52 = scmp.eq.s32.totalorder %s12, 0
      %p53 = por %p51, %p52
      %p54 = scmp.ne.s32.totalorder %s46, %s48
      %p55 = scmp.eq.s32.totalorder %s17, 1
      %p56 = por %p54, %p55
      %p57 = scmp.ne.s32.totalorder %s48, %s49
      %p58 = scmp.eq.s32.totalorder %s17, 0
      %p59 = por %p57, %p58
      %p60 = scmp.ne.s32.totalorder %s48, %s49
      %p61 = scmp.eq.s32.totalorder %s18, 1
      %p62 = por %p60, %p61
      %p64 = scmp.ne.s32.totalorder %s49, %s63
      %p65 = scmp.eq.s32.totalorder %s18, 0
      %p66 = por %p64, %p65
      %s68 = sadd.s32 %s67, 1
      %p71 = scmp.eq.s32.totalorder %s12, 1
      %p72 = scmp.ne.s32.totalorder %s67, %s69
      %p73 = scmp.eq.s32.totalorder %s12, 0
      %p74 = por %p72, %p73
      %p75 = scmp.ne.s32.totalorder %s67, %s69
      %p76 = scmp.eq.s32.totalorder %s17, 1
      %p77 = por %p75, %p76
      %p78 = scmp.ne.s32.totalorder %s69, %s70
      %p79 = scmp.eq.s32.totalorder %s17, 0
      %p80 = por %p78, %p79
      %p81 = scmp.ne.s32.totalorder %s69, %s70
      %p82 = scmp.eq.s32.totalorder %s18, 1
      %p83 = por %p81, %p82
      %p85 = scmp.ne.s32.totalorder %s70, %s84
      %p86 = scmp.eq.s32.totalorder %s18, 0
      %p87 = por %p85, %p86
      %s88 = ssub.s32 %s12, %s19
      %p89 = scmp.eq.s32.totalorder %s88, 0
      %s91 = sadd.s32 %s90, 1
      %s92 = scalar_select %p89, %s90, %s91
      %p95 = pneg %p89
      %p96 = scmp.eq.s32.totalorder %s12, 1
      %p97 = por %p95, %p96
      %p98 = scmp.ne.s32.totalorder %s90, %s93
      %p99 = scmp.eq.s32.totalorder %s12, 0
      %p100 = por %p98, %p99
      %p101 = scmp.ne.s32.totalorder %s90, %s93
      %p102 = scmp.eq.s32.totalorder %s17, 1
      %p103 = por %p101, %p102
      %p104 = scmp.ne.s32.totalorder %s93, %s94
      %p105 = scmp.eq.s32.totalorder %s17, 0
      %p106 = por %p104, %p105
      %p107 = scmp.ne.s32.totalorder %s93, %s94
      %p108 = scmp.eq.s32.totalorder %s18, 1
      %p109 = por %p107, %p108
      %p111 = scmp.ne.s32.totalorder %s94, %s110
      %p112 = scmp.eq.s32.totalorder %s18, 0
      %p113 = por %p111, %p112
      %p114 = scmp.le.s32.totalorder 1, %s12
      %p115 = scmp.lt.s32.totalorder %s12, 3
      %p116 = pnand %p114, %p115
      %p117 = pneg %p116
      // Predicated region
      $region9: #{tpu_custom_call.1} parent=5 // pred_check
        _
      $region10: #{tpu_custom_call.1} parent=5 // pred_check_branch
        %119 = sbr.rel (%p116) target = $region12
      $region11: #{tpu_custom_call.1} parent=5 // pred_region
        %s120 = ssub.s32 %s12, 1
        // Predicated region
        $region13: #{tpu_custom_call.1} parent=11 // pred_check
          %p121 = pneg %p59
        $region14: #{tpu_custom_call.1} parent=11 // pred_check_branch
          %123 = sbr.rel (%p121) target = $region16
        $region15: #{tpu_custom_call.1} parent=11 // pred_region
          _
        $region16: #{tpu_custom_call.1} parent=11 // pred_fallthru
          _
        // Predicated region
        $region17: #{tpu_custom_call.1} parent=11 // pred_check
          %p124 = pneg %p80
        $region18: #{tpu_custom_call.1} parent=11 // pred_check_branch
          %126 = sbr.rel (%p124) target = $region20
        $region19: #{tpu_custom_call.1} parent=11 // pred_region
          _
        $region20: #{tpu_custom_call.1} parent=11 // pred_fallthru
          _
      $region12: #{tpu_custom_call.1} parent=5 // pred_fallthru
        _
      %p127 = scmp.lt.s32.totalorder %s12, 2
      // Predicated region
      $region21: #{tpu_custom_call.1} parent=5 // pred_check
        %p128 = pneg %p127
      $region22: #{tpu_custom_call.1} parent=5 // pred_check_branch
        %130 = sbr.rel (%p128) target = $region24
      $region23: #{tpu_custom_call.1} parent=5 // pred_region
        // Predicated region
        $region25: #{tpu_custom_call.1} parent=23 // pred_check
          %p131 = pneg %p32
        $region26: #{tpu_custom_call.1} parent=23 // pred_check_branch
          %133 = sbr.rel (%p131) target = $region28
        $region27: #{tpu_custom_call.1} parent=23 // pred_region
          %p134 = scmp.lt.s32.totalorder %s12, 1
          %s135 = scalar_select %p134, %s12, 1
          %s136 = smul.addr %s135, 256
          %s137 = smul.addr %s136, 8
          %s138 = scalar_lea.vmem %s0, %s137
        $region28: #{tpu_custom_call.1} parent=23 // pred_fallthru
          _
      $region24: #{tpu_custom_call.1} parent=5 // pred_fallthru
        _
      %p139 = scmp.le.s32.totalorder 1, %s12
      %p140 = scmp.lt.s32.totalorder %s12, 3
      %p141 = pnand %p139, %p140
      %p142 = pneg %p141
      // Predicated region
      $region29: #{tpu_custom_call.1} parent=5 // pred_check
        _
      $region30: #{tpu_custom_call.1} parent=5 // pred_check_branch
        %144 = sbr.rel (%p141) target = $region32
      $region31: #{tpu_custom_call.1} parent=5 // pred_region
        %s145 = ssub.s32 %s12, 1
        %p146 = scmp.lt.s32.totalorder %s17, 1
        %s147 = scalar_select %p146, %s17, 1
        %s148 = smul.addr %s147, 256
        %s149 = smul.addr %s148, 8
        %s150 = scalar_lea.vmem %s0, %s149
        %p151 = pneg %p38
        %p152 = pneg %p35
        %p153 = pneg %p59
        %p154 = pneg %p56
        %p155 = pneg %p80
        %p156 = pneg %p77
        %p157 = pneg %p106
        %p158 = pneg %p103
        %s159 = sand.u32 %s93, 1
        %s160 = scalar_lea.sflag [#allocation3], %s159
        %s161 = sand.u32 %s93, 1
        %s162 = scalar_lea.vmem [#allocation2], %s161
        %p163 = scmp.lt.s32.totalorder %s17, 1
        %s164 = scalar_select %p163, %s17, 1
        %s165 = smul.addr %s164, 256
        %s166 = smul.addr %s165, 8
        %s167 = scalar_lea.vmem %s0, %s166
        %v168 = vld [vmem:[%s167] sm:$0xff]
        %v169 = vld [vmem:[%s167 + $0x8] sm:$0xff]
        %v170 = vld [vmem:[%s167 + $0x10] sm:$0xff]
        %v171 = vld [vmem:[%s167 + $0x18] sm:$0xff]
        %v172 = vld [vmem:[%s167 + $0x20] sm:$0xff]
        %v173 = vld [vmem:[%s167 + $0x28] sm:$0xff]
        %v174 = vld [vmem:[%s167 + $0x30] sm:$0xff]
        %v175 = vld [vmem:[%s167 + $0x38] sm:$0xff]
        %v176 = vld [vmem:[%s167 + $0x40] sm:$0xff]
        %v177 = vld [vmem:[%s167 + $0x48] sm:$0xff]
        %v178 = vld [vmem:[%s167 + $0x50] sm:$0xff]
        %v179 = vld [vmem:[%s167 + $0x58] sm:$0xff]
        %v180 = vld [vmem:[%s167 + $0x60] sm:$0xff]
        %v181 = vld [vmem:[%s167 + $0x68] sm:$0xff]
        %v182 = vld [vmem:[%s167 + $0x70] sm:$0xff]
        %v183 = vld [vmem:[%s167 + $0x78] sm:$0xff]
        %v184 = vld [vmem:[%s167 + $0x80] sm:$0xff]
        %v185 = vld [vmem:[%s167 + $0x88] sm:$0xff]
        %v186 = vld [vmem:[%s167 + $0x90] sm:$0xff]
        %v187 = vld [vmem:[%s167 + $0x98] sm:$0xff]
        %v188 = vld [vmem:[%s167 + $0xa0] sm:$0xff]
        %v189 = vld [vmem:[%s167 + $0xa8] sm:$0xff]
        %v190 = vld [vmem:[%s167 + $0xb0] sm:$0xff]
        %v191 = vld [vmem:[%s167 + $0xb8] sm:$0xff]
        %v192 = vld [vmem:[%s167 + $0xc0] sm:$0xff]
        %v193 = vld [vmem:[%s167 + $0xc8] sm:$0xff]
        %v194 = vld [vmem:[%s167 + $0xd0] sm:$0xff]
        %v195 = vld [vmem:[%s167 + $0xd8] sm:$0xff]
        %v196 = vld [vmem:[%s167 + $0xe0] sm:$0xff]
        %v197 = vld [vmem:[%s167 + $0xe8] sm:$0xff]
        %v198 = vld [vmem:[%s167 + $0xf0] sm:$0xff]
        %v199 = vld [vmem:[%s167 + $0xf8] sm:$0xff]
        %v200 = vld [vmem:[%s167 + $0x100] sm:$0xff]
        %v201 = vld [vmem:[%s167 + $0x108] sm:$0xff]
        %v202 = vld [vmem:[%s167 + $0x110] sm:$0xff]
        %v203 = vld [vmem:[%s167 + $0x118] sm:$0xff]
        %v204 = vld [vmem:[%s167 + $0x120] sm:$0xff]
        %v205 = vld [vmem:[%s167 + $0x128] sm:$0xff]
        %v206 = vld [vmem:[%s167 + $0x130] sm:$0xff]
        %v207 = vld [vmem:[%s167 + $0x138] sm:$0xff]
        %v208 = vld [vmem:[%s167 + $0x140] sm:$0xff]
        %v209 = vld [vmem:[%s167 + $0x148] sm:$0xff]
        %v210 = vld [vmem:[%s167 + $0x150] sm:$0xff]
        %v211 = vld [vmem:[%s167 + $0x158] sm:$0xff]
        %v212 = vld [vmem:[%s167 + $0x160] sm:$0xff]
        %v213 = vld [vmem:[%s167 + $0x168] sm:$0xff]
        %v214 = vld [vmem:[%s167 + $0x170] sm:$0xff]
        %v215 = vld [vmem:[%s167 + $0x178] sm:$0xff]
        %v216 = vld [vmem:[%s167 + $0x180] sm:$0xff]
        %v217 = vld [vmem:[%s167 + $0x188] sm:$0xff]
        %v218 = vld [vmem:[%s167 + $0x190] sm:$0xff]
        %v219 = vld [vmem:[%s167 + $0x198] sm:$0xff]
        %v220 = vld [vmem:[%s167 + $0x1a0] sm:$0xff]
        %v221 = vld [vmem:[%s167 + $0x1a8] sm:$0xff]
        %v222 = vld [vmem:[%s167 + $0x1b0] sm:$0xff]
        %v223 = vld [vmem:[%s167 + $0x1b8] sm:$0xff]
        %v224 = vld [vmem:[%s167 + $0x1c0] sm:$0xff]
        %v225 = vld [vmem:[%s167 + $0x1c8] sm:$0xff]
        %v226 = vld [vmem:[%s167 + $0x1d0] sm:$0xff]
        %v227 = vld [vmem:[%s167 + $0x1d8] sm:$0xff]
        %v228 = vld [vmem:[%s167 + $0x1e0] sm:$0xff]
        %v229 = vld [vmem:[%s167 + $0x1e8] sm:$0xff]
        %v230 = vld [vmem:[%s167 + $0x1f0] sm:$0xff]
        %v231 = vld [vmem:[%s167 + $0x1f8] sm:$0xff]
        %v232 = vld [vmem:[%s167 + $0x200] sm:$0xff]
        %v233 = vld [vmem:[%s167 + $0x208] sm:$0xff]
        %v234 = vld [vmem:[%s167 + $0x210] sm:$0xff]
        %v235 = vld [vmem:[%s167 + $0x218] sm:$0xff]
        %v236 = vld [vmem:[%s167 + $0x220] sm:$0xff]
        %v237 = vld [vmem:[%s167 + $0x228] sm:$0xff]
        %v238 = vld [vmem:[%s167 + $0x230] sm:$0xff]
        %v239 = vld [vmem:[%s167 + $0x238] sm:$0xff]
        %v240 = vld [vmem:[%s167 + $0x240] sm:$0xff]
        %v241 = vld [vmem:[%s167 + $0x248] sm:$0xff]
        %v242 = vld [vmem:[%s167 + $0x250] sm:$0xff]
        %v243 = vld [vmem:[%s167 + $0x258] sm:$0xff]
        %v244 = vld [vmem:[%s167 + $0x260] sm:$0xff]
        %v245 = vld [vmem:[%s167 + $0x268] sm:$0xff]
        %v246 = vld [vmem:[%s167 + $0x270] sm:$0xff]
        %v247 = vld [vmem:[%s167 + $0x278] sm:$0xff]
        %v248 = vld [vmem:[%s167 + $0x280] sm:$0xff]
        %v249 = vld [vmem:[%s167 + $0x288] sm:$0xff]
        %v250 = vld [vmem:[%s167 + $0x290] sm:$0xff]
        %v251 = vld [vmem:[%s167 + $0x298] sm:$0xff]
        %v252 = vld [vmem:[%s167 + $0x2a0] sm:$0xff]
        %v253 = vld [vmem:[%s167 + $0x2a8] sm:$0xff]
        %v254 = vld [vmem:[%s167 + $0x2b0] sm:$0xff]
        %v255 = vld [vmem:[%s167 + $0x2b8] sm:$0xff]
        %v256 = vld [vmem:[%s167 + $0x2c0] sm:$0xff]
        %v257 = vld [vmem:[%s167 + $0x2c8] sm:$0xff]
        %v258 = vld [vmem:[%s167 + $0x2d0] sm:$0xff]
        %v259 = vld [vmem:[%s167 + $0x2d8] sm:$0xff]
        %v260 = vld [vmem:[%s167 + $0x2e0] sm:$0xff]
        %v261 = vld [vmem:[%s167 + $0x2e8] sm:$0xff]
        %v262 = vld [vmem:[%s167 + $0x2f0] sm:$0xff]
        %v263 = vld [vmem:[%s167 + $0x2f8] sm:$0xff]
        %v264 = vld [vmem:[%s167 + $0x300] sm:$0xff]
        %v265 = vld [vmem:[%s167 + $0x308] sm:$0xff]
        %v266 = vld [vmem:[%s167 + $0x310] sm:$0xff]
        %v267 = vld [vmem:[%s167 + $0x318] sm:$0xff]
        %v268 = vld [vmem:[%s167 + $0x320] sm:$0xff]
        %v269 = vld [vmem:[%s167 + $0x328] sm:$0xff]
        %v270 = vld [vmem:[%s167 + $0x330] sm:$0xff]
        %v271 = vld [vmem:[%s167 + $0x338] sm:$0xff]
        %v272 = vld [vmem:[%s167 + $0x340] sm:$0xff]
        %v273 = vld [vmem:[%s167 + $0x348] sm:$0xff]
        %v274 = vld [vmem:[%s167 + $0x350] sm:$0xff]
        %v275 = vld [vmem:[%s167 + $0x358] sm:$0xff]
        %v276 = vld [vmem:[%s167 + $0x360] sm:$0xff]
        %v277 = vld [vmem:[%s167 + $0x368] sm:$0xff]
        %v278 = vld [vmem:[%s167 + $0x370] sm:$0xff]
        %v279 = vld [vmem:[%s167 + $0x378] sm:$0xff]
        %v280 = vld [vmem:[%s167 + $0x380] sm:$0xff]
        %v281 = vld [vmem:[%s167 + $0x388] sm:$0xff]
        %v282 = vld [vmem:[%s167 + $0x390] sm:$0xff]
        %v283 = vld [vmem:[%s167 + $0x398] sm:$0xff]
        %v284 = vld [vmem:[%s167 + $0x3a0] sm:$0xff]
        %v285 = vld [vmem:[%s167 + $0x3a8] sm:$0xff]
        %v286 = vld [vmem:[%s167 + $0x3b0] sm:$0xff]
        %v287 = vld [vmem:[%s167 + $0x3b8] sm:$0xff]
        %v288 = vld [vmem:[%s167 + $0x3c0] sm:$0xff]
        %v289 = vld [vmem:[%s167 + $0x3c8] sm:$0xff]
        %v290 = vld [vmem:[%s167 + $0x3d0] sm:$0xff]
        %v291 = vld [vmem:[%s167 + $0x3d8] sm:$0xff]
        %v292 = vld [vmem:[%s167 + $0x3e0] sm:$0xff]
        %v293 = vld [vmem:[%s167 + $0x3e8] sm:$0xff]
        %v294 = vld [vmem:[%s167 + $0x3f0] sm:$0xff]
        %v295 = vld [vmem:[%s167 + $0x3f8] sm:$0xff]
        %v296 = vld [vmem:[%s167 + $0x400] sm:$0xff]
        %v297 = vld [vmem:[%s167 + $0x408] sm:$0xff]
        %v298 = vld [vmem:[%s167 + $0x410] sm:$0xff]
        %v299 = vld [vmem:[%s167 + $0x418] sm:$0xff]
        %v300 = vld [vmem:[%s167 + $0x420] sm:$0xff]
        %v301 = vld [vmem:[%s167 + $0x428] sm:$0xff]
        %v302 = vld [vmem:[%s167 + $0x430] sm:$0xff]
        %v303 = vld [vmem:[%s167 + $0x438] sm:$0xff]
        %v304 = vld [vmem:[%s167 + $0x440] sm:$0xff]
        %v305 = vld [vmem:[%s167 + $0x448] sm:$0xff]
        %v306 = vld [vmem:[%s167 + $0x450] sm:$0xff]
        %v307 = vld [vmem:[%s167 + $0x458] sm:$0xff]
        %v308 = vld [vmem:[%s167 + $0x460] sm:$0xff]
        %v309 = vld [vmem:[%s167 + $0x468] sm:$0xff]
        %v310 = vld [vmem:[%s167 + $0x470] sm:$0xff]
        %v311 = vld [vmem:[%s167 + $0x478] sm:$0xff]
        %v312 = vld [vmem:[%s167 + $0x480] sm:$0xff]
        %v313 = vld [vmem:[%s167 + $0x488] sm:$0xff]
        %v314 = vld [vmem:[%s167 + $0x490] sm:$0xff]
        %v315 = vld [vmem:[%s167 + $0x498] sm:$0xff]
        %v316 = vld [vmem:[%s167 + $0x4a0] sm:$0xff]
        %v317 = vld [vmem:[%s167 + $0x4a8] sm:$0xff]
        %v318 = vld [vmem:[%s167 + $0x4b0] sm:$0xff]
        %v319 = vld [vmem:[%s167 + $0x4b8] sm:$0xff]
        %v320 = vld [vmem:[%s167 + $0x4c0] sm:$0xff]
        %v321 = vld [vmem:[%s167 + $0x4c8] sm:$0xff]
        %v322 = vld [vmem:[%s167 + $0x4d0] sm:$0xff]
        %v323 = vld [vmem:[%s167 + $0x4d8] sm:$0xff]
        %v324 = vld [vmem:[%s167 + $0x4e0] sm:$0xff]
        %v325 = vld [vmem:[%s167 + $0x4e8] sm:$0xff]
        %v326 = vld [vmem:[%s167 + $0x4f0] sm:$0xff]
        %v327 = vld [vmem:[%s167 + $0x4f8] sm:$0xff]
        %v328 = vld [vmem:[%s167 + $0x500] sm:$0xff]
        %v329 = vld [vmem:[%s167 + $0x508] sm:$0xff]
        %v330 = vld [vmem:[%s167 + $0x510] sm:$0xff]
        %v331 = vld [vmem:[%s167 + $0x518] sm:$0xff]
        %v332 = vld [vmem:[%s167 + $0x520] sm:$0xff]
        %v333 = vld [vmem:[%s167 + $0x528] sm:$0xff]
        %v334 = vld [vmem:[%s167 + $0x530] sm:$0xff]
        %v335 = vld [vmem:[%s167 + $0x538] sm:$0xff]
        %v336 = vld [vmem:[%s167 + $0x540] sm:$0xff]
        %v337 = vld [vmem:[%s167 + $0x548] sm:$0xff]
        %v338 = vld [vmem:[%s167 + $0x550] sm:$0xff]
        %v339 = vld [vmem:[%s167 + $0x558] sm:$0xff]
        %v340 = vld [vmem:[%s167 + $0x560] sm:$0xff]
        %v341 = vld [vmem:[%s167 + $0x568] sm:$0xff]
        %v342 = vld [vmem:[%s167 + $0x570] sm:$0xff]
        %v343 = vld [vmem:[%s167 + $0x578] sm:$0xff]
        %v344 = vld [vmem:[%s167 + $0x580] sm:$0xff]
        %v345 = vld [vmem:[%s167 + $0x588] sm:$0xff]
        %v346 = vld [vmem:[%s167 + $0x590] sm:$0xff]
        %v347 = vld [vmem:[%s167 + $0x598] sm:$0xff]
        %v348 = vld [vmem:[%s167 + $0x5a0] sm:$0xff]
        %v349 = vld [vmem:[%s167 + $0x5a8] sm:$0xff]
        %v350 = vld [vmem:[%s167 + $0x5b0] sm:$0xff]
        %v351 = vld [vmem:[%s167 + $0x5b8] sm:$0xff]
        %v352 = vld [vmem:[%s167 + $0x5c0] sm:$0xff]
        %v353 = vld [vmem:[%s167 + $0x5c8] sm:$0xff]
        %v354 = vld [vmem:[%s167 + $0x5d0] sm:$0xff]
        %v355 = vld [vmem:[%s167 + $0x5d8] sm:$0xff]
        %v356 = vld [vmem:[%s167 + $0x5e0] sm:$0xff]
        %v357 = vld [vmem:[%s167 + $0x5e8] sm:$0xff]
        %v358 = vld [vmem:[%s167 + $0x5f0] sm:$0xff]
        %v359 = vld [vmem:[%s167 + $0x5f8] sm:$0xff]
        %v360 = vld [vmem:[%s167 + $0x600] sm:$0xff]
        %v361 = vld [vmem:[%s167 + $0x608] sm:$0xff]
        %v362 = vld [vmem:[%s167 + $0x610] sm:$0xff]
        %v363 = vld [vmem:[%s167 + $0x618] sm:$0xff]
        %v364 = vld [vmem:[%s167 + $0x620] sm:$0xff]
        %v365 = vld [vmem:[%s167 + $0x628] sm:$0xff]
        %v366 = vld [vmem:[%s167 + $0x630] sm:$0xff]
        %v367 = vld [vmem:[%s167 + $0x638] sm:$0xff]
        %v368 = vld [vmem:[%s167 + $0x640] sm:$0xff]
        %v369 = vld [vmem:[%s167 + $0x648] sm:$0xff]
        %v370 = vld [vmem:[%s167 + $0x650] sm:$0xff]
        %v371 = vld [vmem:[%s167 + $0x658] sm:$0xff]
        %v372 = vld [vmem:[%s167 + $0x660] sm:$0xff]
        %v373 = vld [vmem:[%s167 + $0x668] sm:$0xff]
        %v374 = vld [vmem:[%s167 + $0x670] sm:$0xff]
        %v375 = vld [vmem:[%s167 + $0x678] sm:$0xff]
        %v376 = vld [vmem:[%s167 + $0x680] sm:$0xff]
        %v377 = vld [vmem:[%s167 + $0x688] sm:$0xff]
        %v378 = vld [vmem:[%s167 + $0x690] sm:$0xff]
        %v379 = vld [vmem:[%s167 + $0x698] sm:$0xff]
        %v380 = vld [vmem:[%s167 + $0x6a0] sm:$0xff]
        %v381 = vld [vmem:[%s167 + $0x6a8] sm:$0xff]
        %v382 = vld [vmem:[%s167 + $0x6b0] sm:$0xff]
        %v383 = vld [vmem:[%s167 + $0x6b8] sm:$0xff]
        %v384 = vld [vmem:[%s167 + $0x6c0] sm:$0xff]
        %v385 = vld [vmem:[%s167 + $0x6c8] sm:$0xff]
        %v386 = vld [vmem:[%s167 + $0x6d0] sm:$0xff]
        %v387 = vld [vmem:[%s167 + $0x6d8] sm:$0xff]
        %v388 = vld [vmem:[%s167 + $0x6e0] sm:$0xff]
        %v389 = vld [vmem:[%s167 + $0x6e8] sm:$0xff]
        %v390 = vld [vmem:[%s167 + $0x6f0] sm:$0xff]
        %v391 = vld [vmem:[%s167 + $0x6f8] sm:$0xff]
        %v392 = vld [vmem:[%s167 + $0x700] sm:$0xff]
        %v393 = vld [vmem:[%s167 + $0x708] sm:$0xff]
        %v394 = vld [vmem:[%s167 + $0x710] sm:$0xff]
        %v395 = vld [vmem:[%s167 + $0x718] sm:$0xff]
        %v396 = vld [vmem:[%s167 + $0x720] sm:$0xff]
        %v397 = vld [vmem:[%s167 + $0x728] sm:$0xff]
        %v398 = vld [vmem:[%s167 + $0x730] sm:$0xff]
        %v399 = vld [vmem:[%s167 + $0x738] sm:$0xff]
        %v400 = vld [vmem:[%s167 + $0x740] sm:$0xff]
        %v401 = vld [vmem:[%s167 + $0x748] sm:$0xff]
        %v402 = vld [vmem:[%s167 + $0x750] sm:$0xff]
        %v403 = vld [vmem:[%s167 + $0x758] sm:$0xff]
        %v404 = vld [vmem:[%s167 + $0x760] sm:$0xff]
        %v405 = vld [vmem:[%s167 + $0x768] sm:$0xff]
        %v406 = vld [vmem:[%s167 + $0x770] sm:$0xff]
        %v407 = vld [vmem:[%s167 + $0x778] sm:$0xff]
        %v408 = vld [vmem:[%s167 + $0x780] sm:$0xff]
        %v409 = vld [vmem:[%s167 + $0x788] sm:$0xff]
        %v410 = vld [vmem:[%s167 + $0x790] sm:$0xff]
        %v411 = vld [vmem:[%s167 + $0x798] sm:$0xff]
        %v412 = vld [vmem:[%s167 + $0x7a0] sm:$0xff]
        %v413 = vld [vmem:[%s167 + $0x7a8] sm:$0xff]
        %v414 = vld [vmem:[%s167 + $0x7b0] sm:$0xff]
        %v415 = vld [vmem:[%s167 + $0x7b8] sm:$0xff]
        %v416 = vld [vmem:[%s167 + $0x7c0] sm:$0xff]
        %v417 = vld [vmem:[%s167 + $0x7c8] sm:$0xff]
        %v418 = vld [vmem:[%s167 + $0x7d0] sm:$0xff]
        %v419 = vld [vmem:[%s167 + $0x7d8] sm:$0xff]
        %v420 = vld [vmem:[%s167 + $0x7e0] sm:$0xff]
        %v421 = vld [vmem:[%s167 + $0x7e8] sm:$0xff]
        %v422 = vld [vmem:[%s167 + $0x7f0] sm:$0xff]
        %v423 = vld [vmem:[%s167 + $0x7f8] sm:$0xff]
        %v424 = vld [vmem:[%s1] sm:$0xff]
        %v425 = vld [vmem:[%s1 + $0x8] sm:$0xff]
        %v426 = vld [vmem:[%s1 + $0x10] sm:$0xff]
        %v427 = vld [vmem:[%s1 + $0x18] sm:$0xff]
        %v428 = vld [vmem:[%s1 + $0x20] sm:$0xff]
        %v429 = vld [vmem:[%s1 + $0x28] sm:$0xff]
        %v430 = vld [vmem:[%s1 + $0x30] sm:$0xff]
        %v431 = vld [vmem:[%s1 + $0x38] sm:$0xff]
        %v440 = vcombine.high %v424, %v424
        %v441 = vcombine.high %v425, %v425
        %v442 = vcombine.high %v426, %v426
        %v443 = vcombine.high %v427, %v427
        %v444 = vcombine.high %v428, %v428
        %v445 = vcombine.high %v429, %v429
        %v446 = vcombine.high %v430, %v430
        %v447 = vcombine.high %v431, %v431
        %456 = vmatprep.subr.mxu0 0.0
        %457 = vmatpush1.msra.mxu0 %v168
        %458 = vmatprep.subr.mxu0 0.0
        %459 = vmatpush1.msra.mxu0 %v169
        %460 = vmatprep.subr.mxu0 0.0
        %461 = vmatpush1.msra.mxu0 %v170
        %462 = vmatprep.subr.mxu0 0.0
        %463 = vmatpush1.msra.mxu0 %v171
        %464 = vmatprep.subr.mxu0 0.0
        %465 = vmatpush1.msra.mxu0 %v172
        %466 = vmatprep.subr.mxu0 0.0
        %467 = vmatpush1.msra.mxu0 %v173
        %468 = vmatprep.subr.mxu0 0.0
        %469 = vmatpush1.msra.mxu0 %v174
        %470 = vmatprep.subr.mxu0 0.0
        %471 = vmatpush1.msra.mxu0 %v175
        %472 = vmatprep.subr.mxu0 0.0
        %473 = vmatpush1.msra.mxu0 %v176
        %474 = vmatprep.subr.mxu0 0.0
        %475 = vmatpush1.msra.mxu0 %v177
        %476 = vmatprep.subr.mxu0 0.0
        %477 = vmatpush1.msra.mxu0 %v178
        %478 = vmatprep.subr.mxu0 0.0
        %479 = vmatpush1.msra.mxu0 %v179
        %480 = vmatprep.subr.mxu0 0.0
        %481 = vmatpush1.msra.mxu0 %v180
        %482 = vmatprep.subr.mxu0 0.0
        %483 = vmatpush1.msra.mxu0 %v181
        %484 = vmatprep.subr.mxu0 0.0
        %485 = vmatpush1.msra.mxu0 %v182
        %486 = vmatprep.subr.mxu0 0.0
        %487 = vmatpush1.msra.mxu0 %v183
        %488 = vmatprep.subr.mxu0 0.0
        %489 = vmatpush1.msra.mxu0 %v184
        %490 = vmatprep.subr.mxu0 0.0
        %491 = vmatpush1.msra.mxu0 %v185
        %492 = vmatprep.subr.mxu0 0.0
        %493 = vmatpush1.msra.mxu0 %v186
        %494 = vmatprep.subr.mxu0 0.0
        %495 = vmatpush1.msra.mxu0 %v187
        %496 = vmatprep.subr.mxu0 0.0
        %497 = vmatpush1.msra.mxu0 %v188
        %498 = vmatprep.subr.mxu0 0.0
        %499 = vmatpush1.msra.mxu0 %v189
        %500 = vmatprep.subr.mxu0 0.0
        %501 = vmatpush1.msra.mxu0 %v190
        %502 = vmatprep.subr.mxu0 0.0
        %503 = vmatpush1.msra.mxu0 %v191
        %504 = vmatprep.subr.mxu0 0.0
        %505 = vmatpush1.msra.mxu0 %v192
        %506 = vmatprep.subr.mxu0 0.0
        %507 = vmatpush1.msra.mxu0 %v193
        %508 = vmatprep.subr.mxu0 0.0
        %509 = vmatpush1.msra.mxu0 %v194
        %510 = vmatprep.subr.mxu0 0.0
        %511 = vmatpush1.msra.mxu0 %v195
        %512 = vmatprep.subr.mxu0 0.0
        %513 = vmatpush1.msra.mxu0 %v196
        %514 = vmatprep.subr.mxu0 0.0
        %515 = vmatpush1.msra.mxu0 %v197
        %516 = vmatprep.subr.mxu0 0.0
        %517 = vmatpush1.msra.mxu0 %v198
        %518 = vmatprep.subr.mxu0 0.0
        %519 = vmatpush1.msra.mxu0 %v199
        %520 = vmatprep.mubr.f32.mxu0 %v440
        %521 = vmatmul.mubr.f32.gmra.mrb[0].mxu0 %v424
        %v522 = vpop.f32.mrb[0].mxu0
        %v523 = vadd.f32 0.0, %v522
        %v524 = vpop.f32.mrb[0].mxu0
        %525 = vdwg.mxu0
        %526 = vmatprep.subr.mxu0 0.0
        %527 = vmatpush1.msra.mxu0 %v200
        %528 = vmatprep.subr.mxu0 0.0
        %529 = vmatpush1.msra.mxu0 %v201
        %530 = vmatprep.subr.mxu0 0.0
        %531 = vmatpush1.msra.mxu0 %v202
        %532 = vmatprep.subr.mxu0 0.0
        %533 = vmatpush1.msra.mxu0 %v203
        %534 = vmatprep.subr.mxu0 0.0
        %535 = vmatpush1.msra.mxu0 %v204
        %536 = vmatprep.subr.mxu0 0.0
        %537 = vmatpush1.msra.mxu0 %v205
        %538 = vmatprep.subr.mxu0 0.0
        %539 = vmatpush1.msra.mxu0 %v206
        %540 = vmatprep.subr.mxu0 0.0
        %541 = vmatpush1.msra.mxu0 %v207
        %542 = vmatprep.subr.mxu0 0.0
        %543 = vmatpush1.msra.mxu0 %v208
        %544 = vmatprep.subr.mxu0 0.0
        %545 = vmatpush1.msra.mxu0 %v209
        %546 = vmatprep.subr.mxu0 0.0
        %547 = vmatpush1.msra.mxu0 %v210
        %548 = vmatprep.subr.mxu0 0.0
        %549 = vmatpush1.msra.mxu0 %v211
        %550 = vmatprep.subr.mxu0 0.0
        %551 = vmatpush1.msra.mxu0 %v212
        %552 = vmatprep.subr.mxu0 0.0
        %553 = vmatpush1.msra.mxu0 %v213
        %554 = vmatprep.subr.mxu0 0.0
        %555 = vmatpush1.msra.mxu0 %v214
        %556 = vmatprep.subr.mxu0 0.0
        %557 = vmatpush1.msra.mxu0 %v215
        %558 = vmatprep.subr.mxu0 0.0
        %559 = vmatpush1.msra.mxu0 %v216
        %560 = vmatprep.subr.mxu0 0.0
        %561 = vmatpush1.msra.mxu0 %v217
        %562 = vmatprep.subr.mxu0 0.0
        %563 = vmatpush1.msra.mxu0 %v218
        %564 = vmatprep.subr.mxu0 0.0
        %565 = vmatpush1.msra.mxu0 %v219
        %566 = vmatprep.subr.mxu0 0.0
        %567 = vmatpush1.msra.mxu0 %v220
        %568 = vmatprep.subr.mxu0 0.0
        %569 = vmatpush1.msra.mxu0 %v221
        %570 = vmatprep.subr.mxu0 0.0
        %571 = vmatpush1.msra.mxu0 %v222
        %572 = vmatprep.subr.mxu0 0.0
        %573 = vmatpush1.msra.mxu0 %v223
        %574 = vmatprep.subr.mxu0 0.0
        %575 = vmatpush1.msra.mxu0 %v224
        %576 = vmatprep.subr.mxu0 0.0
        %577 = vmatpush1.msra.mxu0 %v225
        %578 = vmatprep.subr.mxu0 0.0
        %579 = vmatpush1.msra.mxu0 %v226
        %580 = vmatprep.subr.mxu0 0.0
        %581 = vmatpush1.msra.mxu0 %v227
        %582 = vmatprep.subr.mxu0 0.0
        %583 = vmatpush1.msra.mxu0 %v228
        %584 = vmatprep.subr.mxu0 0.0
        %585 = vmatpush1.msra.mxu0 %v229
        %586 = vmatprep.subr.mxu0 0.0
        %587 = vmatpush1.msra.mxu0 %v230
        %588 = vmatprep.subr.mxu0 0.0
        %589 = vmatpush1.msra.mxu0 %v231
        %590 = vmatprep.mubr.f32.mxu0 %v441
        %591 = vmatmul.mubr.f32.gmra.mrb[0].mxu0 %v425
        %v592 = vpop.f32.mrb[0].mxu0
        %v593 = vadd.f32 %v523, %v592
        %v594 = vpop.f32.mrb[0].mxu0
        %595 = vdwg.mxu0
        %596 = vmatprep.subr.mxu0 0.0
        %597 = vmatpush1.msra.mxu0 %v232
        %598 = vmatprep.subr.mxu0 0.0
        %599 = vmatpush1.msra.mxu0 %v233
        %600 = vmatprep.subr.mxu0 0.0
        %601 = vmatpush1.msra.mxu0 %v234
        %602 = vmatprep.subr.mxu0 0.0
        %603 = vmatpush1.msra.mxu0 %v235
        %604 = vmatprep.subr.mxu0 0.0
        %605 = vmatpush1.msra.mxu0 %v236
        %606 = vmatprep.subr.mxu0 0.0
        %607 = vmatpush1.msra.mxu0 %v237
        %608 = vmatprep.subr.mxu0 0.0
        %609 = vmatpush1.msra.mxu0 %v238
        %610 = vmatprep.subr.mxu0 0.0
        %611 = vmatpush1.msra.mxu0 %v239
        %612 = vmatprep.subr.mxu0 0.0
        %613 = vmatpush1.msra.mxu0 %v240
        %614 = vmatprep.subr.mxu0 0.0
        %615 = vmatpush1.msra.mxu0 %v241
        %616 = vmatprep.subr.mxu0 0.0
        %617 = vmatpush1.msra.mxu0 %v242
        %618 = vmatprep.subr.mxu0 0.0
        %619 = vmatpush1.msra.mxu0 %v243
        %620 = vmatprep.subr.mxu0 0.0
        %621 = vmatpush1.msra.mxu0 %v244
        %622 = vmatprep.subr.mxu0 0.0
        %623 = vmatpush1.msra.mxu0 %v245
        %624 = vmatprep.subr.mxu0 0.0
        %625 = vmatpush1.msra.mxu0 %v246
        %626 = vmatprep.subr.mxu0 0.0
        %627 = vmatpush1.msra.mxu0 %v247
        %628 = vmatprep.subr.mxu0 0.0
        %629 = vmatpush1.msra.mxu0 %v248
        %630 = vmatprep.subr.mxu0 0.0
        %631 = vmatpush1.msra.mxu0 %v249
        %632 = vmatprep.subr.mxu0 0.0
        %633 = vmatpush1.msra.mxu0 %v250
        %634 = vmatprep.subr.mxu0 0.0
        %635 = vmatpush1.msra.mxu0 %v251
        %636 = vmatprep.subr.mxu0 0.0
        %637 = vmatpush1.msra.mxu0 %v252
        %638 = vmatprep.subr.mxu0 0.0
        %639 = vmatpush1.msra.mxu0 %v253
        %640 = vmatprep.subr.mxu0 0.0
        %641 = vmatpush1.msra.mxu0 %v254
        %642 = vmatprep.subr.mxu0 0.0
        %643 = vmatpush1.msra.mxu0 %v255
        %644 = vmatprep.subr.mxu0 0.0
        %645 = vmatpush1.msra.mxu0 %v256
        %646 = vmatprep.subr.mxu0 0.0
        %647 = vmatpush1.msra.mxu0 %v257
        %648 = vmatprep.subr.mxu0 0.0
        %649 = vmatpush1.msra.mxu0 %v258
        %650 = vmatprep.subr.mxu0 0.0
        %651 = vmatpush1.msra.mxu0 %v259
        %652 = vmatprep.subr.mxu0 0.0
        %653 = vmatpush1.msra.mxu0 %v260
        %654 = vmatprep.subr.mxu0 0.0
        %655 = vmatpush1.msra.mxu0 %v261
        %656 = vmatprep.subr.mxu0 0.0
        %657 = vmatpush1.msra.mxu0 %v262
        %658 = vmatprep.subr.mxu0 0.0
        %659 = vmatpush1.msra.mxu0 %v263
        %660 = vmatprep.mubr.f32.mxu0 %v442
        %661 = vmatmul.mubr.f32.gmra.mrb[0].mxu0 %v426
        %v662 = vpop.f32.mrb[0].mxu0
        %v663 = vadd.f32 %v593, %v662
        %v664 = vpop.f32.mrb[0].mxu0
        %665 = vdwg.mxu0
        %666 = vmatprep.subr.mxu0 0.0
        %667 = vmatpush1.msra.mxu0 %v264
        %668 = vmatprep.subr.mxu0 0.0
        %669 = vmatpush1.msra.mxu0 %v265
        %670 = vmatprep.subr.mxu0 0.0
        %671 = vmatpush1.msra.mxu0 %v266
        %672 = vmatprep.subr.mxu0 0.0
        %673 = vmatpush1.msra.mxu0 %v267
        %674 = vmatprep.subr.mxu0 0.0
        %675 = vmatpush1.msra.mxu0 %v268
        %676 = vmatprep.subr.mxu0 0.0
        %677 = vmatpush1.msra.mxu0 %v269
        %678 = vmatprep.subr.mxu0 0.0
        %679 = vmatpush1.msra.mxu0 %v270
        %680 = vmatprep.subr.mxu0 0.0
        %681 = vmatpush1.msra.mxu0 %v271
        %682 = vmatprep.subr.mxu0 0.0
        %683 = vmatpush1.msra.mxu0 %v272
        %684 = vmatprep.subr.mxu0 0.0
        %685 = vmatpush1.msra.mxu0 %v273
        %686 = vmatprep.subr.mxu0 0.0
        %687 = vmatpush1.msra.mxu0 %v274
        %688 = vmatprep.subr.mxu0 0.0
        %689 = vmatpush1.msra.mxu0 %v275
        %690 = vmatprep.subr.mxu0 0.0
        %691 = vmatpush1.msra.mxu0 %v276
        %692 = vmatprep.subr.mxu0 0.0
        %693 = vmatpush1.msra.mxu0 %v277
        %694 = vmatprep.subr.mxu0 0.0
        %695 = vmatpush1.msra.mxu0 %v278
        %696 = vmatprep.subr.mxu0 0.0
        %697 = vmatpush1.msra.mxu0 %v279
        %698 = vmatprep.subr.mxu0 0.0
        %699 = vmatpush1.msra.mxu0 %v280
        %700 = vmatprep.subr.mxu0 0.0
        %701 = vmatpush1.msra.mxu0 %v281
        %702 = vmatprep.subr.mxu0 0.0
        %703 = vmatpush1.msra.mxu0 %v282
        %704 = vmatprep.subr.mxu0 0.0
        %705 = vmatpush1.msra.mxu0 %v283
        %706 = vmatprep.subr.mxu0 0.0
        %707 = vmatpush1.msra.mxu0 %v284
        %708 = vmatprep.subr.mxu0 0.0
        %709 = vmatpush1.msra.mxu0 %v285
        %710 = vmatprep.subr.mxu0 0.0
        %711 = vmatpush1.msra.mxu0 %v286
        %712 = vmatprep.subr.mxu0 0.0
        %713 = vmatpush1.msra.mxu0 %v287
        %714 = vmatprep.subr.mxu0 0.0
        %715 = vmatpush1.msra.mxu0 %v288
        %716 = vmatprep.subr.mxu0 0.0
        %717 = vmatpush1.msra.mxu0 %v289
        %718 = vmatprep.subr.mxu0 0.0
        %719 = vmatpush1.msra.mxu0 %v290
        %720 = vmatprep.subr.mxu0 0.0
        %721 = vmatpush1.msra.mxu0 %v291
        %722 = vmatprep.subr.mxu0 0.0
        %723 = vmatpush1.msra.mxu0 %v292
        %724 = vmatprep.subr.mxu0 0.0
        %725 = vmatpush1.msra.mxu0 %v293
        %726 = vmatprep.subr.mxu0 0.0
        %727 = vmatpush1.msra.mxu0 %v294
        %728 = vmatprep.subr.mxu0 0.0
        %729 = vmatpush1.msra.mxu0 %v295
        %730 = vmatprep.mubr.f32.mxu0 %v443
        %731 = vmatmul.mubr.f32.gmra.mrb[0].mxu0 %v427
        %v732 = vpop.f32.mrb[0].mxu0
        %v733 = vadd.f32 %v663, %v732
        %v734 = vpop.f32.mrb[0].mxu0
        %735 = vdwg.mxu0
        %736 = vmatprep.subr.mxu0 0.0
        %737 = vmatpush1.msra.mxu0 %v296
        %738 = vmatprep.subr.mxu0 0.0
        %739 = vmatpush1.msra.mxu0 %v297
        %740 = vmatprep.subr.mxu0 0.0
        %741 = vmatpush1.msra.mxu0 %v298
        %742 = vmatprep.subr.mxu0 0.0
        %743 = vmatpush1.msra.mxu0 %v299
        %744 = vmatprep.subr.mxu0 0.0
        %745 = vmatpush1.msra.mxu0 %v300
        %746 = vmatprep.subr.mxu0 0.0
        %747 = vmatpush1.msra.mxu0 %v301
        %748 = vmatprep.subr.mxu0 0.0
        %749 = vmatpush1.msra.mxu0 %v302
        %750 = vmatprep.subr.mxu0 0.0
        %751 = vmatpush1.msra.mxu0 %v303
        %752 = vmatprep.subr.mxu0 0.0
        %753 = vmatpush1.msra.mxu0 %v304
        %754 = vmatprep.subr.mxu0 0.0
        %755 = vmatpush1.msra.mxu0 %v305
        %756 = vmatprep.subr.mxu0 0.0
        %757 = vmatpush1.msra.mxu0 %v306
        %758 = vmatprep.subr.mxu0 0.0
        %759 = vmatpush1.msra.mxu0 %v307
        %760 = vmatprep.subr.mxu0 0.0
        %761 = vmatpush1.msra.mxu0 %v308
        %762 = vmatprep.subr.mxu0 0.0
        %763 = vmatpush1.msra.mxu0 %v309
        %764 = vmatprep.subr.mxu0 0.0
        %765 = vmatpush1.msra.mxu0 %v310
        %766 = vmatprep.subr.mxu0 0.0
        %767 = vmatpush1.msra.mxu0 %v311
        %768 = vmatprep.subr.mxu0 0.0
        %769 = vmatpush1.msra.mxu0 %v312
        %770 = vmatprep.subr.mxu0 0.0
        %771 = vmatpush1.msra.mxu0 %v313
        %772 = vmatprep.subr.mxu0 0.0
        %773 = vmatpush1.msra.mxu0 %v314
        %774 = vmatprep.subr.mxu0 0.0
        %775 = vmatpush1.msra.mxu0 %v315
        %776 = vmatprep.subr.mxu0 0.0
        %777 = vmatpush1.msra.mxu0 %v316
        %778 = vmatprep.subr.mxu0 0.0
        %779 = vmatpush1.msra.mxu0 %v317
        %780 = vmatprep.subr.mxu0 0.0
        %781 = vmatpush1.msra.mxu0 %v318
        %782 = vmatprep.subr.mxu0 0.0
        %783 = vmatpush1.msra.mxu0 %v319
        %784 = vmatprep.subr.mxu0 0.0
        %785 = vmatpush1.msra.mxu0 %v320
        %786 = vmatprep.subr.mxu0 0.0
        %787 = vmatpush1.msra.mxu0 %v321
        %788 = vmatprep.subr.mxu0 0.0
        %789 = vmatpush1.msra.mxu0 %v322
        %790 = vmatprep.subr.mxu0 0.0
        %791 = vmatpush1.msra.mxu0 %v323
        %792 = vmatprep.subr.mxu0 0.0
        %793 = vmatpush1.msra.mxu0 %v324
        %794 = vmatprep.subr.mxu0 0.0
        %795 = vmatpush1.msra.mxu0 %v325
        %796 = vmatprep.subr.mxu0 0.0
        %797 = vmatpush1.msra.mxu0 %v326
        %798 = vmatprep.subr.mxu0 0.0
        %799 = vmatpush1.msra.mxu0 %v327
        %800 = vmatprep.mubr.f32.mxu0 %v444
        %801 = vmatmul.mubr.f32.gmra.mrb[0].mxu0 %v428
        %v802 = vpop.f32.mrb[0].mxu0
        %v803 = vadd.f32 %v733, %v802
        %v804 = vpop.f32.mrb[0].mxu0
        %805 = vdwg.mxu0
        %806 = vmatprep.subr.mxu0 0.0
        %807 = vmatpush1.msra.mxu0 %v328
        %808 = vmatprep.subr.mxu0 0.0
        %809 = vmatpush1.msra.mxu0 %v329
        %810 = vmatprep.subr.mxu0 0.0
        %811 = vmatpush1.msra.mxu0 %v330
        %812 = vmatprep.subr.mxu0 0.0
        %813 = vmatpush1.msra.mxu0 %v331
        %814 = vmatprep.subr.mxu0 0.0
        %815 = vmatpush1.msra.mxu0 %v332
        %816 = vmatprep.subr.mxu0 0.0
        %817 = vmatpush1.msra.mxu0 %v333
        %818 = vmatprep.subr.mxu0 0.0
        %819 = vmatpush1.msra.mxu0 %v334
        %820 = vmatprep.subr.mxu0 0.0
        %821 = vmatpush1.msra.mxu0 %v335
        %822 = vmatprep.subr.mxu0 0.0
        %823 = vmatpush1.msra.mxu0 %v336
        %824 = vmatprep.subr.mxu0 0.0
        %825 = vmatpush1.msra.mxu0 %v337
        %826 = vmatprep.subr.mxu0 0.0
        %827 = vmatpush1.msra.mxu0 %v338
        %828 = vmatprep.subr.mxu0 0.0
        %829 = vmatpush1.msra.mxu0 %v339
        %830 = vmatprep.subr.mxu0 0.0
        %831 = vmatpush1.msra.mxu0 %v340
        %832 = vmatprep.subr.mxu0 0.0
        %833 = vmatpush1.msra.mxu0 %v341
        %834 = vmatprep.subr.mxu0 0.0
        %835 = vmatpush1.msra.mxu0 %v342
        %836 = vmatprep.subr.mxu0 0.0
        %837 = vmatpush1.msra.mxu0 %v343
        %838 = vmatprep.subr.mxu0 0.0
        %839 = vmatpush1.msra.mxu0 %v344
        %840 = vmatprep.subr.mxu0 0.0
        %841 = vmatpush1.msra.mxu0 %v345
        %842 = vmatprep.subr.mxu0 0.0
        %843 = vmatpush1.msra.mxu0 %v346
        %844 = vmatprep.subr.mxu0 0.0
        %845 = vmatpush1.msra.mxu0 %v347
        %846 = vmatprep.subr.mxu0 0.0
        %847 = vmatpush1.msra.mxu0 %v348
        %848 = vmatprep.subr.mxu0 0.0
        %849 = vmatpush1.msra.mxu0 %v349
        %850 = vmatprep.subr.mxu0 0.0
        %851 = vmatpush1.msra.mxu0 %v350
        %852 = vmatprep.subr.mxu0 0.0
        %853 = vmatpush1.msra.mxu0 %v351
        %854 = vmatprep.subr.mxu0 0.0
        %855 = vmatpush1.msra.mxu0 %v352
        %856 = vmatprep.subr.mxu0 0.0
        %857 = vmatpush1.msra.mxu0 %v353
        %858 = vmatprep.subr.mxu0 0.0
        %859 = vmatpush1.msra.mxu0 %v354
        %860 = vmatprep.subr.mxu0 0.0
        %861 = vmatpush1.msra.mxu0 %v355
        %862 = vmatprep.subr.mxu0 0.0
        %863 = vmatpush1.msra.mxu0 %v356
        %864 = vmatprep.subr.mxu0 0.0
        %865 = vmatpush1.msra.mxu0 %v357
        %866 = vmatprep.subr.mxu0 0.0
        %867 = vmatpush1.msra.mxu0 %v358
        %868 = vmatprep.subr.mxu0 0.0
        %869 = vmatpush1.msra.mxu0 %v359
        %870 = vmatprep.mubr.f32.mxu0 %v445
        %871 = vmatmul.mubr.f32.gmra.mrb[0].mxu0 %v429
        %v872 = vpop.f32.mrb[0].mxu0
        %v873 = vadd.f32 %v803, %v872
        %v874 = vpop.f32.mrb[0].mxu0
        %875 = vdwg.mxu0
        %876 = vmatprep.subr.mxu0 0.0
        %877 = vmatpush1.msra.mxu0 %v360
        %878 = vmatprep.subr.mxu0 0.0
        %879 = vmatpush1.msra.mxu0 %v361
        %880 = vmatprep.subr.mxu0 0.0
        %881 = vmatpush1.msra.mxu0 %v362
        %882 = vmatprep.subr.mxu0 0.0
        %883 = vmatpush1.msra.mxu0 %v363
        %884 = vmatprep.subr.mxu0 0.0
        %885 = vmatpush1.msra.mxu0 %v364
        %886 = vmatprep.subr.mxu0 0.0
        %887 = vmatpush1.msra.mxu0 %v365
        %888 = vmatprep.subr.mxu0 0.0
        %889 = vmatpush1.msra.mxu0 %v366
        %890 = vmatprep.subr.mxu0 0.0
        %891 = vmatpush1.msra.mxu0 %v367
        %892 = vmatprep.subr.mxu0 0.0
        %893 = vmatpush1.msra.mxu0 %v368
        %894 = vmatprep.subr.mxu0 0.0
        %895 = vmatpush1.msra.mxu0 %v369
        %896 = vmatprep.subr.mxu0 0.0
        %897 = vmatpush1.msra.mxu0 %v370
        %898 = vmatprep.subr.mxu0 0.0
        %899 = vmatpush1.msra.mxu0 %v371
        %900 = vmatprep.subr.mxu0 0.0
        %901 = vmatpush1.msra.mxu0 %v372
        %902 = vmatprep.subr.mxu0 0.0
        %903 = vmatpush1.msra.mxu0 %v373
        %904 = vmatprep.subr.mxu0 0.0
        %905 = vmatpush1.msra.mxu0 %v374
        %906 = vmatprep.subr.mxu0 0.0
        %907 = vmatpush1.msra.mxu0 %v375
        %908 = vmatprep.subr.mxu0 0.0
        %909 = vmatpush1.msra.mxu0 %v376
        %910 = vmatprep.subr.mxu0 0.0
        %911 = vmatpush1.msra.mxu0 %v377
        %912 = vmatprep.subr.mxu0 0.0
        %913 = vmatpush1.msra.mxu0 %v378
        %914 = vmatprep.subr.mxu0 0.0
        %915 = vmatpush1.msra.mxu0 %v379
        %916 = vmatprep.subr.mxu0 0.0
        %917 = vmatpush1.msra.mxu0 %v380
        %918 = vmatprep.subr.mxu0 0.0
        %919 = vmatpush1.msra.mxu0 %v381
        %920 = vmatprep.subr.mxu0 0.0
        %921 = vmatpush1.msra.mxu0 %v382
        %922 = vmatprep.subr.mxu0 0.0
        %923 = vmatpush1.msra.mxu0 %v383
        %924 = vmatprep.subr.mxu0 0.0
        %925 = vmatpush1.msra.mxu0 %v384
        %926 = vmatprep.subr.mxu0 0.0
        %927 = vmatpush1.msra.mxu0 %v385
        %928 = vmatprep.subr.mxu0 0.0
        %929 = vmatpush1.msra.mxu0 %v386
        %930 = vmatprep.subr.mxu0 0.0
        %931 = vmatpush1.msra.mxu0 %v387
        %932 = vmatprep.subr.mxu0 0.0
        %933 = vmatpush1.msra.mxu0 %v388
        %934 = vmatprep.subr.mxu0 0.0
        %935 = vmatpush1.msra.mxu0 %v389
        %936 = vmatprep.subr.mxu0 0.0
        %937 = vmatpush1.msra.mxu0 %v390
        %938 = vmatprep.subr.mxu0 0.0
        %939 = vmatpush1.msra.mxu0 %v391
        %940 = vmatprep.mubr.f32.mxu0 %v446
        %941 = vmatmul.mubr.f32.gmra.mrb[0].mxu0 %v430
        %v942 = vpop.f32.mrb[0].mxu0
        %v943 = vadd.f32 %v873, %v942
        %v944 = vpop.f32.mrb[0].mxu0
        %945 = vdwg.mxu0
        %946 = vmatprep.subr.mxu0 0.0
        %947 = vmatpush1.msra.mxu0 %v392
        %948 = vmatprep.subr.mxu0 0.0
        %949 = vmatpush1.msra.mxu0 %v393
        %950 = vmatprep.subr.mxu0 0.0
        %951 = vmatpush1.msra.mxu0 %v394
        %952 = vmatprep.subr.mxu0 0.0
        %953 = vmatpush1.msra.mxu0 %v395
        %954 = vmatprep.subr.mxu0 0.0
        %955 = vmatpush1.msra.mxu0 %v396
        %956 = vmatprep.subr.mxu0 0.0
        %957 = vmatpush1.msra.mxu0 %v397
        %958 = vmatprep.subr.mxu0 0.0
        %959 = vmatpush1.msra.mxu0 %v398
        %960 = vmatprep.subr.mxu0 0.0
        %961 = vmatpush1.msra.mxu0 %v399
        %962 = vmatprep.subr.mxu0 0.0
        %963 = vmatpush1.msra.mxu0 %v400
        %964 = vmatprep.subr.mxu0 0.0
        %965 = vmatpush1.msra.mxu0 %v401
        %966 = vmatprep.subr.mxu0 0.0
        %967 = vmatpush1.msra.mxu0 %v402
        %968 = vmatprep.subr.mxu0 0.0
        %969 = vmatpush1.msra.mxu0 %v403
        %970 = vmatprep.subr.mxu0 0.0
        %971 = vmatpush1.msra.mxu0 %v404
        %972 = vmatprep.subr.mxu0 0.0
        %973 = vmatpush1.msra.mxu0 %v405
        %974 = vmatprep.subr.mxu0 0.0
        %975 = vmatpush1.msra.mxu0 %v406
        %976 = vmatprep.subr.mxu0 0.0
        %977 = vmatpush1.msra.mxu0 %v407
        %978 = vmatprep.subr.mxu0 0.0
        %979 = vmatpush1.msra.mxu0 %v408
        %980 = vmatprep.subr.mxu0 0.0
        %981 = vmatpush1.msra.mxu0 %v409
        %982 = vmatprep.subr.mxu0 0.0
        %983 = vmatpush1.msra.mxu0 %v410
        %984 = vmatprep.subr.mxu0 0.0
        %985 = vmatpush1.msra.mxu0 %v411
        %986 = vmatprep.subr.mxu0 0.0
        %987 = vmatpush1.msra.mxu0 %v412
        %988 = vmatprep.subr.mxu0 0.0
        %989 = vmatpush1.msra.mxu0 %v413
        %990 = vmatprep.subr.mxu0 0.0
        %991 = vmatpush1.msra.mxu0 %v414
        %992 = vmatprep.subr.mxu0 0.0
        %993 = vmatpush1.msra.mxu0 %v415
        %994 = vmatprep.subr.mxu0 0.0
        %995 = vmatpush1.msra.mxu0 %v416
        %996 = vmatprep.subr.mxu0 0.0
        %997 = vmatpush1.msra.mxu0 %v417
        %998 = vmatprep.subr.mxu0 0.0
        %999 = vmatpush1.msra.mxu0 %v418
        %1000 = vmatprep.subr.mxu0 0.0
        %1001 = vmatpush1.msra.mxu0 %v419
        %1002 = vmatprep.subr.mxu0 0.0
        %1003 = vmatpush1.msra.mxu0 %v420
        %1004 = vmatprep.subr.mxu0 0.0
        %1005 = vmatpush1.msra.mxu0 %v421
        %1006 = vmatprep.subr.mxu0 0.0
        %1007 = vmatpush1.msra.mxu0 %v422
        %1008 = vmatprep.subr.mxu0 0.0
        %1009 = vmatpush1.msra.mxu0 %v423
        %1010 = vmatprep.mubr.f32.mxu0 %v447
        %1011 = vmatmul.mubr.f32.gmra.mrb[0].mxu0 %v431
        %v1012 = vpop.f32.mrb[0].mxu0
        %v1013 = vadd.f32 %v943, %v1012
        %v1014 = vpop.f32.mrb[0].mxu0
        %1015 = vdwg.mxu0
        %vm1016 = vcmask 519168
        %v1017 = vsel %vm1016, %v1013, 0.0
        %1018 = vadd.xlane.f32.xlu0 %v1017
        %v1019 = vpop.xlane.xlu0 %1018
        %v1020 = vmul.f32 %v1019, 0.015625
        %v1021 = vld [vmem:[%s2] sm:$0x1]
        %v1023 = vlaneseq
        %v1024 = vshrl.u32 %v1023, 7
        %v1025 = vsub.s32 0, %v1024
        %v1026 = vrot.slane %v1021, %v1025
        %1028 = vbcast.lane.b32.xlu0 %v1026, 256
        %v1029 = vpop.permute.xlu0 %1028
        %v1031 = vadd.f32 %v1020, %v1029
        %1033 = vset.pattern.permute.xlu0 0
        %1034 = vperm.xlu0 %1033, %v1031
        %v1035 = vpop.permute.xlu0 %1034
        %v1036 = vlaneseq
        %v1037 = vand.u32 %v1036, 127
        %v1038 = vlaneseq
        %v1039 = vshrl.u32 %v1038, 7
        %v1040 = vsub.s32 %v1037, %v1039
        %v1041 = vrot.slane %v1035, %v1040
        %vm1043 = vcmask 24576
        %1044 = vst.msk [vmem:[%s162] sm:$0x1] %vm1043, %v1041
        %s1045 = sand.u32 %s93, 1
        %s1046 = scalar_lea.sflag [#allocation3], %s1045
        %s1047 = sand.u32 %s93, 1
        %s1048 = scalar_lea.vmem [#allocation2], %s1047
        // Predicated region
        $region33: #{tpu_custom_call.1} parent=31 // pred_check
          %p1049 = pneg %p103
        $region34: #{tpu_custom_call.1} parent=31 // pred_check_branch
          %1051 = sbr.rel (%p1049) target = $region36
        $region35: #{tpu_custom_call.1} parent=31 // pred_region
          %s1053 = ssub.s32 16, 16
          %1054 = vsyncadd %s1046, %s1053
          %s1055 = smul.addr %s17, 16
          %s1056 = scalar_lea.hbm %s3, %s1055
          %s1058 = sshll.u32 %s1048, 4
          %s1059 = int_to_ptr.vmem [resolvable:$true] %s1058
          %1061 = dma.vmem_to_hbm [thread:$0]  %s1059, 16, %s1056, %s1046
        $region36: #{tpu_custom_call.1} parent=31 // pred_fallthru
          _
      $region32: #{tpu_custom_call.1} parent=5 // pred_fallthru
        _
      %p1062 = scmp.le.s32.totalorder 2, %s12
      // Predicated region
      $region37: #{tpu_custom_call.1} parent=5 // pred_check
        %p1063 = pneg %p1062
      $region38: #{tpu_custom_call.1} parent=5 // pred_check_branch
        %1065 = sbr.rel (%p1063) target = $region40
      $region39: #{tpu_custom_call.1} parent=5 // pred_region
        %s1066 = ssub.s32 %s12, 2
        // Predicated region
        $region41: #{tpu_custom_call.1} parent=39 // pred_check
          %p1067 = pneg %p109
        $region42: #{tpu_custom_call.1} parent=39 // pred_check_branch
          %1069 = sbr.rel (%p1067) target = $region44
        $region43: #{tpu_custom_call.1} parent=39 // pred_region
          %s1070 = sand.u32 %s94, 1
          %s1071 = scalar_lea.sflag [#allocation3], %s1070
          %s1072 = sand.u32 %s94, 1
          %s1073 = scalar_lea.vmem [#allocation2], %s1072
          %1074 = dma.done %s1071, 16
        $region44: #{tpu_custom_call.1} parent=39 // pred_fallthru
          _
      $region40: #{tpu_custom_call.1} parent=5 // pred_fallthru
        _
    $region6: #{tpu_custom_call.1} parent=1 // loop_footer
      %s16 = sadd.s32 1, %s12
    $region7: #{tpu_custom_call.1} parent=1 // loop_footer_branch
      %11 = sbr.rel target = $region3
    $region8: #{tpu_custom_call.1} parent=1 // loop_exit
      _
    %1075 = vsyncpa [#allocation3], 1
    %s1076 = scalar_lea.sflag [#allocation3], 1
    %1077 = vsyncpa %s1076, 1

</llo_original>
